<compile_context>
chip_gen: v7x
topology: tpu7x:2x2x1
jax: 0.10.0
libtpu: 0.0.40
codegen_flags: <defaults>
</compile_context>

<pallas_src>
import functools

import jax
import jax.numpy as jnp
from jax import lax
from jax.experimental import pallas as pl
from jax.experimental.pallas import tpu as pltpu


def _round_up(v, m):
    return (v + m - 1) // m * m


def _gcn_kernel(adj_ref, rhs_ref, *refs, cdt, o_valid, n_valid, tk,
                reassociate, mask_k, approx):
    """One (row-tile, k-tile) grid step.

    Streams a (tm, tk) slab of adj, accumulates adj @ rhs into an f32 VMEM
    scratch, and at the last k step runs the row-local epilogue
    (optional @W, relu, MLP, min-max scale, L2 normalize)."""
    if reassociate:
        w_ref, wm_ref, b_ref, out_ref, acc_ref = refs
    else:
        wm_ref, b_ref, out_ref, acc_ref = refs
        w_ref = None

    k = pl.program_id(1)

    @pl.when(k == 0)
    def _init():
        acc_ref[...] = jnp.zeros_like(acc_ref)

    # adj may arrive as int8 (quantized) -> dequantize to the compute dtype
    # right before the MXU dot (its global scale is folded into rhs).
    adj_t = adj_ref[...].astype(cdt)
    rhs_t = rhs_ref[...]
    if mask_k:
        # Ragged last k tile: zero BOTH sides of the padded contraction range
        # (padded VMEM may hold arbitrary stale bits, including inf/nan).
        col = k * tk + lax.broadcasted_iota(jnp.int32, adj_t.shape, 1)
        adj_t = jnp.where(col < n_valid, adj_t, 0)
        row = k * tk + lax.broadcasted_iota(jnp.int32, rhs_t.shape, 0)
        rhs_t = jnp.where(row < n_valid, rhs_t, 0)

    acc_ref[...] += jnp.dot(adj_t, rhs_t, preferred_element_type=jnp.float32)

    @pl.when(k == pl.num_programs(1) - 1)
    def _epilogue():
        agg = acc_ref[...]                                    # (tm, F_in or H)
        if reassociate:                                       # (adj @ x) @ W
            agg = jnp.dot(agg.astype(cdt), w_ref[...],
                          preferred_element_type=jnp.float32)
        h = jnp.maximum(agg, 0.0)                             # relu

        # MLP: Wm already transposed + lane-padded to o_pad in the wrapper.
        y = jnp.dot(h.astype(cdt), wm_ref[...],
                    preferred_element_type=jnp.float32) + b_ref[...]

        # scale(): per-row min/max over the *valid* output columns only.
        o_pad = y.shape[-1]
        if o_valid != o_pad:
            col = lax.broadcasted_iota(jnp.int32, y.shape, 1)
            valid = col < o_valid
            y_max = jnp.where(valid, y, -jnp.inf)
            y_min = jnp.where(valid, y, jnp.inf)
        else:
            valid = None
            y_max = y
            y_min = y
        zmax = jnp.max(y_max, axis=1, keepdims=True)
        zmin = jnp.min(y_min, axis=1, keepdims=True)
        rng = zmax - zmin
        diff = y - zmin
        if approx:
            z = diff * pl.reciprocal(rng, approx=True)        # EUP slot
        else:
            z = diff / rng                                    # exact epilogue

        # F.normalize: L2 over valid columns, eps = 1e-12.
        zsq = z * z
        if valid is not None:
            zsq = jnp.where(valid, zsq, 0.0)
        sumsq = jnp.sum(zsq, axis=1, keepdims=True)
        if approx:
            out = z * lax.rsqrt(jnp.maximum(sumsq, 1e-24))
        else:
            out = z / jnp.maximum(jnp.sqrt(sumsq), 1e-12)
        out_ref[...] = out.astype(out_ref.dtype)


def pack_mlp_params(mlp_w, mlp_b, lane=128):
    """One-time packing: transpose the nn.Linear weight to (H, O) and zero-pad
    the output dim to a lane-dense multiple of 128."""
    o, h = mlp_w.shape
    o_pad = _round_up(o, lane)
    wm = jnp.zeros((h, o_pad), mlp_w.dtype).at[:, :o].set(mlp_w.T)
    b = jnp.zeros((1, o_pad), mlp_b.dtype).at[:, :o].set(mlp_b)
    return wm, b


def gcn_base_forward(x, adj, weight, mlp_w, mlp_b, *,
                     compute_dtype=jnp.bfloat16, quantize_adj=False,
                     block_rows=512, block_k=2048):
    """x: [N, F_in], adj: [N, N] dense, weight: [F_in, H],
    mlp_w: [O, H] (torch Linear layout), mlp_b: [O]. Returns [N, O] float32."""
    n, f_in = x.shape
    _, hid = weight.shape
    o = mlp_w.shape[0]
    o_pad = _round_up(o, 128)

    cdt = jnp.dtype(compute_dtype)
    approx = cdt == jnp.dtype(jnp.bfloat16)
    reassociate = f_in < hid        # (adj@x)@W beats adj@(x@W) iff F_in < H

    wm_c, b_p = pack_mlp_params(mlp_w, mlp_b)
    wm_c = wm_c.astype(cdt)
    b_f = b_p.astype(jnp.float32)               # bias added to the f32 acc

    if reassociate:
        rhs = x.astype(cdt)                     # stream x; W applied in epilogue
        w_c = weight.astype(cdt)
        f_rhs = f_in
    else:
        # Hoist the tiny x @ W (previously re-done for every row tile).
        rhs = jnp.dot(x, weight).astype(cdt)    # (N, H), once, by XLA
        w_c = None
        f_rhs = hid

    # Adjacency storage dtype: bf16/f32, or int8 with a global scale folded
    # into rhs (HBM-byte lever for this memory-bound kernel).
    if quantize_adj:
        s = jnp.maximum(jnp.max(jnp.abs(adj)), 1e-30) / 127.0
        adj_c = jnp.clip(jnp.round(adj / s), -127, 127).astype(jnp.int8)
        rhs = (rhs * s).astype(cdt)
        adj_isz, row_align = 1, 32
    else:
        adj_c = adj.astype(cdt)
        adj_isz = cdt.itemsize
        row_align = 16 if cdt.itemsize < 4 else 8

    # Row (node) tiling. No padded HBM copy of adj is materialized; Pallas'
    # partial-block handling covers the ragged last row tile.
    tm = _round_up(min(block_rows, _round_up(n, row_align)), row_align)
    # Contraction (adj-column) tiling keeps the VMEM footprint independent of N.
    if n <= block_k:
        tk, mask_k = n, False                   # single k tile, full dim
    else:
        tk = _round_up(block_k, 128)
        mask_k = (n % tk) != 0
    grid = (pl.cdiv(n, tm), pl.cdiv(n, tk))

    # VMEM budget: double-buffered streamed tiles, single-buffered invariants,
    # accumulator + in-kernel temporaries; generation-aware cap.
    isz = cdt.itemsize
    needed = (2 * tm * tk * adj_isz             # adj slabs (double-buffered)
              + tm * tk * isz                   # dequantized adj temp
              + 2 * tk * f_rhs * isz            # rhs k-tiles
              + (f_in * hid * isz if reassociate else 0)
              + hid * o_pad * isz + o_pad * 4   # Wm^T, bias
              + 2 * tm * o_pad * 4              # output blocks
              + tm * f_rhs * 4                  # f32 accumulator
              + 4 * tm * o_pad * 4)             # epilogue temporaries
    try:
        cap = int(0.85 * pltpu.get_tpu_info().vmem_capacity_bytes)
    except Exception:
        cap = 48 << 20                          # safe on every generation
    vmem_limit = int(min(max(needed + (4 << 20), 32 << 20), cap))

    kernel = functools.partial(
        _gcn_kernel, cdt=cdt, o_valid=o, n_valid=n, tk=tk,
        reassociate=reassociate, mask_k=mask_k, approx=approx)

    operands = [adj_c, rhs] + ([w_c] if reassociate else []) + [wm_c, b_f]

    def build_in_specs(single_buffer_invariants):
        def inv(shape):
            idx = lambda *_: (0,) * len(shape)
            if single_buffer_invariants:
                try:    # grid-invariant operand: one VMEM buffer is enough
                    return pl.BlockSpec(shape, idx, pipeline_mode=pl.Buffered(1))
                except TypeError:
                    pass
            return pl.BlockSpec(shape, idx)
        specs = [pl.BlockSpec((tm, tk), lambda i, k: (i, k)),      # adj slab
                 pl.BlockSpec((tk, f_rhs), lambda i, k: (k, 0))]   # x / xw tile
        if reassociate:
            specs.append(inv((f_in, hid)))                         # W
        specs += [inv((hid, o_pad)), inv((1, o_pad))]              # Wm^T, bias
        return specs

    def launch(single_buffer_invariants):
        return pl.pallas_call(
            kernel,
            out_shape=jax.ShapeDtypeStruct((n, o_pad), jnp.float32),
            grid_spec=pltpu.PrefetchScalarGridSpec(
                num_scalar_prefetch=0,
                grid=grid,
                in_specs=build_in_specs(single_buffer_invariants),
                out_specs=pl.BlockSpec((tm, o_pad), lambda i, k: (i, 0)),
                scratch_shapes=[pltpu.VMEM((tm, f_rhs), jnp.float32)]),
            compiler_params=pltpu.CompilerParams(
                dimension_semantics=("parallel", "arbitrary"),
                vmem_limit_bytes=vmem_limit),
        )(*operands)

    try:
        out = launch(True)
    except Exception:   # fall back if this jax build rejects Buffered(1)
        out = launch(False)

    return out[:, :o]


def reference_forward(x, adj, weight, mlp_w, mlp_b):
    """Pure-JAX f32 reference mirroring the PyTorch forward exactly."""
    out = x @ weight
    out = adj @ out
    out = jnp.maximum(out, 0.0)
    out = out @ mlp_w.T + mlp_b
    zmax = out.max(axis=1, keepdims=True)
    zmin = out.min(axis=1, keepdims=True)
    z = (out - zmin) / (zmax - zmin)
    norm = jnp.sqrt(jnp.sum(z * z, axis=1, keepdims=True))
    return z / jnp.maximum(norm, 1e-12)


if __name__ == "__main__":
    # Small shapes consistent with the module: N nodes, in -> hidden -> out.
    N, F_IN, HID, F_OUT = 32, 16, 32, 8

    key = jax.random.PRNGKey(0)
    k_x, k_adj, k_w, k_mw, k_mb = jax.random.split(key, 5)

    x = jax.random.normal(k_x, (N, F_IN), dtype=jnp.float32)

    # symmetric row-normalized adjacency (dense stand-in for the sparse adj)
    a = jax.random.uniform(k_adj, (N, N), dtype=jnp.float32)
    a = (a + a.T) * 0.5 + jnp.eye(N, dtype=jnp.float32)
    adj = a / jnp.sum(a, axis=1, keepdims=True)

    # parameter init matching __init__ shapes
    bound_w = (6.0 / (F_IN + HID)) ** 0.5
    weight = jax.random.uniform(k_w, (F_IN, HID), dtype=jnp.float32,
                                minval=-bound_w, maxval=bound_w)
    bound_m = 1.0 / (HID ** 0.5)
    mlp_w = jax.random.uniform(k_mw, (F_OUT, HID), dtype=jnp.float32,
                               minval=-bound_m, maxval=bound_m)
    mlp_b = jax.random.uniform(k_mb, (F_OUT,), dtype=jnp.float32,
                               minval=-bound_m, maxval=bound_m)

    ref = reference_forward(x, adj, weight, mlp_w, mlp_b)

    # 1) exact path: f32 MXU operands + exact epilogue (only diff vs reference
    #    is matmul reassociation -> tiny rounding differences).
    out_f32 = jax.block_until_ready(
        gcn_base_forward(x, adj, weight, mlp_w, mlp_b,
                         compute_dtype=jnp.float32))
    assert out_f32.shape == (N, F_OUT)
    assert jnp.allclose(out_f32, ref, atol=1e-4, rtol=1e-4), "f32 mismatch"

    # 2) default perf path: bf16 MXU operands with f32 accumulation + EUP
    #    approx reciprocal/rsqrt in the epilogue.
    out_bf16 = jax.block_until_ready(
        gcn_base_forward(x, adj, weight, mlp_w, mlp_b,
                         compute_dtype=jnp.bfloat16))
    assert out_bf16.shape == (N, F_OUT)
    assert jnp.allclose(out_bf16, ref, atol=5e-2), "bf16 mismatch"

    # 3) bandwidth path: int8-quantized adjacency (global scale folded into
    #    the streamed rhs), halving the dominant N^2 HBM stream vs bf16.
    out_q = jax.block_until_ready(
        gcn_base_forward(x, adj, weight, mlp_w, mlp_b,
                         compute_dtype=jnp.bfloat16, quantize_adj=True))
    assert out_q.shape == (N, F_OUT)
    assert jnp.allclose(out_q, ref, atol=1e-1), "int8-adj mismatch"

    print("KERNEL_OK")
</pallas_src>

<mosaic_0001>
module attributes {stable_mosaic.version = 11 : i64} {
  func.func @_gcn_kernel(%arg0: i32, %arg1: i32, %arg2: memref<32x32xf32, #tpu.memory_space<vmem>>, %arg3: memref<32x16xf32, #tpu.memory_space<vmem>>, %arg4: memref<16x32xf32, #tpu.memory_space<vmem>>, %arg5: memref<32x128xf32, #tpu.memory_space<vmem>>, %arg6: memref<1x128xf32, #tpu.memory_space<vmem>>, %arg7: memref<32x128xf32, #tpu.memory_space<vmem>>, %arg8: memref<32x16xf32, #tpu.memory_space<vmem>>) attributes {dimension_semantics = [#tpu.dimension_semantics<parallel>, #tpu.dimension_semantics<arbitrary>], iteration_bounds = array<i64: 1, 1>, scalar_prefetch = 0 : i64, scratch_operands = 1 : i64, tpu.core_type = #tpu.core_type<tc>, window_params = [{transform_indices = @transform_0, window_bounds = array<i64: 32, 32>}, {transform_indices = @transform_1, window_bounds = array<i64: 32, 16>}, {pipeline_mode = #tpu.pipeline_mode<synchronous>, transform_indices = @transform_2, window_bounds = array<i64: 16, 32>}, {pipeline_mode = #tpu.pipeline_mode<synchronous>, transform_indices = @transform_3, window_bounds = array<i64: 32, 128>}, {pipeline_mode = #tpu.pipeline_mode<synchronous>, transform_indices = @transform_4, window_bounds = array<i64: 1, 128>}, {transform_indices = @transform_5, window_bounds = array<i64: 32, 128>}]} {
    %c0_i32 = arith.constant 0 : i32
    %0 = arith.cmpi eq, %arg1, %c0_i32 : i32
    %1 = arith.extui %0 : i1 to i32
    %c0_i32_0 = arith.constant 0 : i32
    %2 = arith.cmpi ne, %1, %c0_i32_0 : i32
    scf.if %2 {
      %cst_10 = arith.constant 0.000000e+00 : f32
      %12 = vector.broadcast %cst_10 : f32 to vector<32x16xf32>
      %c0_11 = arith.constant 0 : index
      %c0_12 = arith.constant 0 : index
      %13 = vector.load %arg8[%c0_11, %c0_12] : memref<32x16xf32, #tpu.memory_space<vmem>>, vector<32x16xf32>
      tpu.vector_store %arg8[%c0_11, %c0_12], %12 {strides = array<i32>} : memref<32x16xf32, #tpu.memory_space<vmem>>, vector<32x16xf32>,
    } else {
    }
    %c0 = arith.constant 0 : index
    %c0_1 = arith.constant 0 : index
    %3 = vector.load %arg2[%c0, %c0_1] : memref<32x32xf32, #tpu.memory_space<vmem>>, vector<32x32xf32>
    %c0_2 = arith.constant 0 : index
    %c0_3 = arith.constant 0 : index
    %4 = vector.load %arg3[%c0_2, %c0_3] : memref<32x16xf32, #tpu.memory_space<vmem>>, vector<32x16xf32>
    %c0_4 = arith.constant 0 : index
    %c0_5 = arith.constant 0 : index
    %5 = vector.load %arg8[%c0_4, %c0_5] : memref<32x16xf32, #tpu.memory_space<vmem>>, vector<32x16xf32>
    %cst = arith.constant dense<0.000000e+00> : vector<32x16xf32>
    %6 = tpu.matmul %3, %4, %cst {dimension_numbers = #tpu.dot_dimension_numbers<[1], [0], [0], [1], [0, 0, 1, 1], [], []>} : vector<32x32xf32>, vector<32x16xf32>, vector<32x16xf32> -> vector<32x16xf32>
    %7 = arith.addf %5, %6 : vector<32x16xf32>
    %c0_6 = arith.constant 0 : index
    %c0_7 = arith.constant 0 : index
    %8 = vector.load %arg8[%c0_6, %c0_7] : memref<32x16xf32, #tpu.memory_space<vmem>>, vector<32x16xf32>
    tpu.vector_store %arg8[%c0_6, %c0_7], %7 {strides = array<i32>} : memref<32x16xf32, #tpu.memory_space<vmem>>, vector<32x16xf32>,
    %c0_i32_8 = arith.constant 0 : i32
    %9 = arith.cmpi eq, %arg1, %c0_i32_8 : i32
    %10 = arith.extui %9 : i1 to i32
    %c0_i32_9 = arith.constant 0 : i32
    %11 = arith.cmpi ne, %10, %c0_i32_9 : i32
    scf.if %11 {
      %c0_10 = arith.constant 0 : index
      %c0_11 = arith.constant 0 : index
      %12 = vector.load %arg8[%c0_10, %c0_11] : memref<32x16xf32, #tpu.memory_space<vmem>>, vector<32x16xf32>
      %c0_12 = arith.constant 0 : index
      %c0_13 = arith.constant 0 : index
      %13 = vector.load %arg4[%c0_12, %c0_13] : memref<16x32xf32, #tpu.memory_space<vmem>>, vector<16x32xf32>
      %cst_14 = arith.constant dense<0.000000e+00> : vector<32x32xf32>
      %14 = tpu.matmul %12, %13, %cst_14 {dimension_numbers = #tpu.dot_dimension_numbers<[1], [0], [0], [1], [0, 0, 1, 1], [], []>} : vector<32x16xf32>, vector<16x32xf32>, vector<32x32xf32> -> vector<32x32xf32>
      %cst_15 = arith.constant 0.000000e+00 : f32
      %15 = vector.broadcast %cst_15 : f32 to vector<32x32xf32>
      %16 = arith.maximumf %14, %15 : vector<32x32xf32>
      %c0_16 = arith.constant 0 : index
      %c0_17 = arith.constant 0 : index
      %17 = vector.load %arg5[%c0_16, %c0_17] : memref<32x128xf32, #tpu.memory_space<vmem>>, vector<32x128xf32>
      %cst_18 = arith.constant dense<0.000000e+00> : vector<32x128xf32>
      %18 = tpu.matmul %16, %17, %cst_18 {dimension_numbers = #tpu.dot_dimension_numbers<[1], [0], [0], [1], [0, 0, 1, 1], [], []>} : vector<32x32xf32>, vector<32x128xf32>, vector<32x128xf32> -> vector<32x128xf32>
      %c0_19 = arith.constant 0 : index
      %c0_20 = arith.constant 0 : index
      %19 = vector.load %arg6[%c0_19, %c0_20] : memref<1x128xf32, #tpu.memory_space<vmem>>, vector<1x128xf32>
      %20 = vector.broadcast %19 : vector<1x128xf32> to vector<32x128xf32>
      %21 = arith.addf %18, %20 : vector<32x128xf32>
      %22 = tpu.iota {dimensions = array<i32: 1>} : vector<32x128xi32>
      %c8_i32 = arith.constant 8 : i32
      %23 = vector.broadcast %c8_i32 : i32 to vector<32x128xi32>
      %24 = arith.cmpi slt, %22, %23 : vector<32x128xi32>
      %cst_21 = arith.constant 0xFF800000 : f32
      %25 = vector.broadcast %cst_21 : f32 to vector<32x128xf32>
      %26 = arith.select %24, %21, %25 : vector<32x128xi1>, vector<32x128xf32>
      %cst_22 = arith.constant 0x7F800000 : f32
      %27 = vector.broadcast %cst_22 : f32 to vector<32x128xf32>
      %28 = arith.select %24, %21, %27 : vector<32x128xi1>, vector<32x128xf32>
      %cst_23 = arith.constant dense<0xFF800000> : vector<32xf32>
      %29 = vector.multi_reduction <maximumf>, %26, %cst_23 [1] : vector<32x128xf32> to vector<32xf32>
      %30 = vector.shape_cast %29 : vector<32xf32> to vector<32x1xf32>
      %cst_24 = arith.constant dense<0x7F800000> : vector<32xf32>
      %31 = vector.multi_reduction <minimumf>, %28, %cst_24 [1] : vector<32x128xf32> to vector<32xf32>
      %32 = vector.shape_cast %31 : vector<32xf32> to vector<32x1xf32>
      %33 = arith.subf %30, %32 : vector<32x1xf32>
      %34 = vector.broadcast %32 : vector<32x1xf32> to vector<32x128xf32>
      %35 = arith.subf %21, %34 : vector<32x128xf32>
      %36 = vector.broadcast %33 : vector<32x1xf32> to vector<32x128xf32>
      %37 = arith.divf %35, %36 : vector<32x128xf32>
      %38 = arith.mulf %37, %37 : vector<32x128xf32>
      %cst_25 = arith.constant 0.000000e+00 : f32
      %39 = vector.broadcast %cst_25 : f32 to vector<32x128xf32>
      %40 = arith.select %24, %38, %39 : vector<32x128xi1>, vector<32x128xf32>
      %cst_26 = arith.constant dense<0.000000e+00> : vector<32xf32>
      %41 = vector.multi_reduction <add>, %40, %cst_26 [1] : vector<32x128xf32> to vector<32xf32>
      %42 = vector.shape_cast %41 : vector<32xf32> to vector<32x1xf32>
      %43 = math.sqrt %42 : vector<32x1xf32>
      %cst_27 = arith.constant 9.99999996E-13 : f32
      %44 = vector.broadcast %cst_27 : f32 to vector<32x1xf32>
      %45 = arith.maximumf %43, %44 : vector<32x1xf32>
      %46 = vector.broadcast %45 : vector<32x1xf32> to vector<32x128xf32>
      %47 = arith.divf %37, %46 : vector<32x128xf32>
      %c0_28 = arith.constant 0 : index
      %c0_29 = arith.constant 0 : index
      %48 = vector.load %arg7[%c0_28, %c0_29] : memref<32x128xf32, #tpu.memory_space<vmem>>, vector<32x128xf32>
      tpu.vector_store %arg7[%c0_28, %c0_29], %47 {strides = array<i32>} : memref<32x128xf32, #tpu.memory_space<vmem>>, vector<32x128xf32>,
    } else {
    }
    return
  }
  func.func @transform_0(%arg0: i32, %arg1: i32) -> (i32, i32) {
    %c0_i32 = arith.constant 0 : i32
    return %arg0, %arg1 : i32, i32
  }
  func.func @transform_1(%arg0: i32, %arg1: i32) -> (i32, i32) {
    %c0_i32 = arith.constant 0 : i32
    %c0_i32_0 = arith.constant 0 : i32
    return %arg1, %c0_i32 : i32, i32
  }
  func.func @transform_2(%arg0: i32, %arg1: i32) -> (i32, i32) {
    %c0_i32 = arith.constant 0 : i32
    %c0_i32_0 = arith.constant 0 : i32
    %c0_i32_1 = arith.constant 0 : i32
    return %c0_i32, %c0_i32_0 : i32, i32
  }
  func.func @transform_3(%arg0: i32, %arg1: i32) -> (i32, i32) {
    %c0_i32 = arith.constant 0 : i32
    %c0_i32_0 = arith.constant 0 : i32
    %c0_i32_1 = arith.constant 0 : i32
    return %c0_i32, %c0_i32_0 : i32, i32
  }
  func.func @transform_4(%arg0: i32, %arg1: i32) -> (i32, i32) {
    %c0_i32 = arith.constant 0 : i32
    %c0_i32_0 = arith.constant 0 : i32
    %c0_i32_1 = arith.constant 0 : i32
    return %c0_i32, %c0_i32_0 : i32, i32
  }
  func.func @transform_5(%arg0: i32, %arg1: i32) -> (i32, i32) {
    %c0_i32 = arith.constant 0 : i32
    %c0_i32_0 = arith.constant 0 : i32
    return %arg0, %c0_i32 : i32, i32
  }
}

module attributes {stable_mosaic.version = 11 : i64} {
  func.func @_gcn_kernel(%arg0: i32, %arg1: i32, %arg2: memref<32x32xf32, #tpu.memory_space<vmem>>, %arg3: memref<32x16xf32, #tpu.memory_space<vmem>>, %arg4: memref<16x32xf32, #tpu.memory_space<vmem>>, %arg5: memref<32x128xf32, #tpu.memory_space<vmem>>, %arg6: memref<1x128xf32, #tpu.memory_space<vmem>>, %arg7: memref<32x128xf32, #tpu.memory_space<vmem>>, %arg8: memref<32x16xf32, #tpu.memory_space<vmem>>) attributes {dimension_semantics = [#tpu.dimension_semantics<parallel>, #tpu.dimension_semantics<arbitrary>], iteration_bounds = array<i64: 1, 1>, scalar_prefetch = 0 : i64, scratch_operands = 1 : i64, tpu.core_type = #tpu.core_type<tc>, window_params = [{transform_indices = @transform_0, window_bounds = array<i64: 32, 32>}, {transform_indices = @transform_1, window_bounds = array<i64: 32, 16>}, {pipeline_mode = #tpu.pipeline_mode<synchronous>, transform_indices = @transform_2, window_bounds = array<i64: 16, 32>}, {pipeline_mode = #tpu.pipeline_mode<synchronous>, transform_indices = @transform_3, window_bounds = array<i64: 32, 128>}, {pipeline_mode = #tpu.pipeline_mode<synchronous>, transform_indices = @transform_4, window_bounds = array<i64: 1, 128>}, {transform_indices = @transform_5, window_bounds = array<i64: 32, 128>}]} {
    %c0_i32 = arith.constant 0 : i32
    %0 = arith.cmpi eq, %arg1, %c0_i32 : i32
    %1 = arith.extui %0 : i1 to i32
    %c0_i32_0 = arith.constant 0 : i32
    %2 = arith.cmpi ne, %1, %c0_i32_0 : i32
    scf.if %2 {
      %cst_10 = arith.constant 0.000000e+00 : f32
      %12 = vector.broadcast %cst_10 : f32 to vector<32x16xf32>
      %c0_11 = arith.constant 0 : index
      %c0_12 = arith.constant 0 : index
      %13 = vector.load %arg8[%c0_11, %c0_12] : memref<32x16xf32, #tpu.memory_space<vmem>>, vector<32x16xf32>
      tpu.vector_store %arg8[%c0_11, %c0_12], %12 {strides = array<i32>} : memref<32x16xf32, #tpu.memory_space<vmem>>, vector<32x16xf32>,
    } else {
    }
    %c0 = arith.constant 0 : index
    %c0_1 = arith.constant 0 : index
    %3 = vector.load %arg2[%c0, %c0_1] : memref<32x32xf32, #tpu.memory_space<vmem>>, vector<32x32xf32>
    %c0_2 = arith.constant 0 : index
    %c0_3 = arith.constant 0 : index
    %4 = vector.load %arg3[%c0_2, %c0_3] : memref<32x16xf32, #tpu.memory_space<vmem>>, vector<32x16xf32>
    %c0_4 = arith.constant 0 : index
    %c0_5 = arith.constant 0 : index
    %5 = vector.load %arg8[%c0_4, %c0_5] : memref<32x16xf32, #tpu.memory_space<vmem>>, vector<32x16xf32>
    %cst = arith.constant dense<0.000000e+00> : vector<32x16xf32>
    %6 = tpu.matmul %3, %4, %cst {dimension_numbers = #tpu.dot_dimension_numbers<[1], [0], [0], [1], [0, 0, 1, 1], [], []>} : vector<32x32xf32>, vector<32x16xf32>, vector<32x16xf32> -> vector<32x16xf32>
    %7 = arith.addf %5, %6 : vector<32x16xf32>
    %c0_6 = arith.constant 0 : index
    %c0_7 = arith.constant 0 : index
    %8 = vector.load %arg8[%c0_6, %c0_7] : memref<32x16xf32, #tpu.memory_space<vmem>>, vector<32x16xf32>
    tpu.vector_store %arg8[%c0_6, %c0_7], %7 {strides = array<i32>} : memref<32x16xf32, #tpu.memory_space<vmem>>, vector<32x16xf32>,
    %c0_i32_8 = arith.constant 0 : i32
    %9 = arith.cmpi eq, %arg1, %c0_i32_8 : i32
    %10 = arith.extui %9 : i1 to i32
    %c0_i32_9 = arith.constant 0 : i32
    %11 = arith.cmpi ne, %10, %c0_i32_9 : i32
    scf.if %11 {
      %c0_10 = arith.constant 0 : index
      %c0_11 = arith.constant 0 : index
      %12 = vector.load %arg8[%c0_10, %c0_11] : memref<32x16xf32, #tpu.memory_space<vmem>>, vector<32x16xf32>
      %c0_12 = arith.constant 0 : index
      %c0_13 = arith.constant 0 : index
      %13 = vector.load %arg4[%c0_12, %c0_13] : memref<16x32xf32, #tpu.memory_space<vmem>>, vector<16x32xf32>
      %cst_14 = arith.constant dense<0.000000e+00> : vector<32x32xf32>
      %14 = tpu.matmul %12, %13, %cst_14 {dimension_numbers = #tpu.dot_dimension_numbers<[1], [0], [0], [1], [0, 0, 1, 1], [], []>} : vector<32x16xf32>, vector<16x32xf32>, vector<32x32xf32> -> vector<32x32xf32>
      %cst_15 = arith.constant 0.000000e+00 : f32
      %15 = vector.broadcast %cst_15 : f32 to vector<32x32xf32>
      %16 = arith.maximumf %14, %15 : vector<32x32xf32>
      %c0_16 = arith.constant 0 : index
      %c0_17 = arith.constant 0 : index
      %17 = vector.load %arg5[%c0_16, %c0_17] : memref<32x128xf32, #tpu.memory_space<vmem>>, vector<32x128xf32>
      %cst_18 = arith.constant dense<0.000000e+00> : vector<32x128xf32>
      %18 = tpu.matmul %16, %17, %cst_18 {dimension_numbers = #tpu.dot_dimension_numbers<[1], [0], [0], [1], [0, 0, 1, 1], [], []>} : vector<32x32xf32>, vector<32x128xf32>, vector<32x128xf32> -> vector<32x128xf32>
      %c0_19 = arith.constant 0 : index
      %c0_20 = arith.constant 0 : index
      %19 = vector.load %arg6[%c0_19, %c0_20] : memref<1x128xf32, #tpu.memory_space<vmem>>, vector<1x128xf32>
      %20 = vector.broadcast %19 : vector<1x128xf32> to vector<32x128xf32>
      %21 = arith.addf %18, %20 : vector<32x128xf32>
      %22 = tpu.iota {dimensions = array<i32: 1>} : vector<32x128xi32>
      %c8_i32 = arith.constant 8 : i32
      %23 = vector.broadcast %c8_i32 : i32 to vector<32x128xi32>
      %24 = arith.cmpi slt, %22, %23 : vector<32x128xi32>
      %cst_21 = arith.constant 0xFF800000 : f32
      %25 = vector.broadcast %cst_21 : f32 to vector<32x128xf32>
      %26 = arith.select %24, %21, %25 : vector<32x128xi1>, vector<32x128xf32>
      %cst_22 = arith.constant 0x7F800000 : f32
      %27 = vector.broadcast %cst_22 : f32 to vector<32x128xf32>
      %28 = arith.select %24, %21, %27 : vector<32x128xi1>, vector<32x128xf32>
      %cst_23 = arith.constant dense<0xFF800000> : vector<32xf32>
      %29 = vector.multi_reduction <maximumf>, %26, %cst_23 [1] : vector<32x128xf32> to vector<32xf32>
      %30 = vector.shape_cast %29 : vector<32xf32> to vector<32x1xf32>
      %cst_24 = arith.constant dense<0x7F800000> : vector<32xf32>
      %31 = vector.multi_reduction <minimumf>, %28, %cst_24 [1] : vector<32x128xf32> to vector<32xf32>
      %32 = vector.shape_cast %31 : vector<32xf32> to vector<32x1xf32>
      %33 = arith.subf %30, %32 : vector<32x1xf32>
      %34 = vector.broadcast %32 : vector<32x1xf32> to vector<32x128xf32>
      %35 = arith.subf %21, %34 : vector<32x128xf32>
      %36 = vector.broadcast %33 : vector<32x1xf32> to vector<32x128xf32>
      %37 = arith.divf %35, %36 : vector<32x128xf32>
      %38 = arith.mulf %37, %37 : vector<32x128xf32>
      %cst_25 = arith.constant 0.000000e+00 : f32
      %39 = vector.broadcast %cst_25 : f32 to vector<32x128xf32>
      %40 = arith.select %24, %38, %39 : vector<32x128xi1>, vector<32x128xf32>
      %cst_26 = arith.constant dense<0.000000e+00> : vector<32xf32>
      %41 = vector.multi_reduction <add>, %40, %cst_26 [1] : vector<32x128xf32> to vector<32xf32>
      %42 = vector.shape_cast %41 : vector<32xf32> to vector<32x1xf32>
      %43 = math.sqrt %42 : vector<32x1xf32>
      %cst_27 = arith.constant 9.99999996E-13 : f32
      %44 = vector.broadcast %cst_27 : f32 to vector<32x1xf32>
      %45 = arith.maximumf %43, %44 : vector<32x1xf32>
      %46 = vector.broadcast %45 : vector<32x1xf32> to vector<32x128xf32>
      %47 = arith.divf %37, %46 : vector<32x128xf32>
      %c0_28 = arith.constant 0 : index
      %c0_29 = arith.constant 0 : index
      %48 = vector.load %arg7[%c0_28, %c0_29] : memref<32x128xf32, #tpu.memory_space<vmem>>, vector<32x128xf32>
      tpu.vector_store %arg7[%c0_28, %c0_29], %47 {strides = array<i32>} : memref<32x128xf32, #tpu.memory_space<vmem>>, vector<32x128xf32>,
    } else {
    }
    return
  }
  func.func @transform_0(%arg0: i32, %arg1: i32) -> (i32, i32) {
    %c0_i32 = arith.constant 0 : i32
    return %arg0, %arg1 : i32, i32
  }
  func.func @transform_1(%arg0: i32, %arg1: i32) -> (i32, i32) {
    %c0_i32 = arith.constant 0 : i32
    %c0_i32_0 = arith.constant 0 : i32
    return %arg1, %c0_i32 : i32, i32
  }
  func.func @transform_2(%arg0: i32, %arg1: i32) -> (i32, i32) {
    %c0_i32 = arith.constant 0 : i32
    %c0_i32_0 = arith.constant 0 : i32
    %c0_i32_1 = arith.constant 0 : i32
    return %c0_i32, %c0_i32_0 : i32, i32
  }
  func.func @transform_3(%arg0: i32, %arg1: i32) -> (i32, i32) {
    %c0_i32 = arith.constant 0 : i32
    %c0_i32_0 = arith.constant 0 : i32
    %c0_i32_1 = arith.constant 0 : i32
    return %c0_i32, %c0_i32_0 : i32, i32
  }
  func.func @transform_4(%arg0: i32, %arg1: i32) -> (i32, i32) {
    %c0_i32 = arith.constant 0 : i32
    %c0_i32_0 = arith.constant 0 : i32
    %c0_i32_1 = arith.constant 0 : i32
    return %c0_i32, %c0_i32_0 : i32, i32
  }
  func.func @transform_5(%arg0: i32, %arg1: i32) -> (i32, i32) {
    %c0_i32 = arith.constant 0 : i32
    %c0_i32_0 = arith.constant 0 : i32
    return %arg0, %c0_i32 : i32, i32
  }
}

</mosaic_0001>

<llo_original>
// kernel: tpu_custom_call.1
$region0: #{tpu_custom_call.1}
  #allocation0 [shape = 'u32[]', space=smem, size = 0x4, offset = 0x4, fixed_abs, tag = 'smem constant byte address 0x4 - core index']
  #allocation1 [shape = 'u32[144,128]{1,0:T(1,128)}', space=vmem, size = 0x12000, scoped, tag = 'internal scratch']
  #allocation2 [shape = 'f32[32,16]{1,0:T(8,128)}', space=vmem, size = 0x4000, scoped, tag = 'scratch operand']
  %s0 = inlined_call_operand.vmem [shape: f32[32,32], index: 0, kind: input, shape index: {}]
  %s1 = inlined_call_operand.vmem [shape: f32[32,16], index: 1, kind: input, shape index: {}]
  %s2 = inlined_call_operand.vmem [shape: f32[16,32], index: 2, kind: input, shape index: {}]
  %s3 = inlined_call_operand.hbm [shape: f32[32,128], index: 3, kind: input, shape index: {}]
  %s4 = inlined_call_operand.vmem [shape: f32[1,128], index: 4, kind: input, shape index: {}]
  %s5 = inlined_call_operand.hbm [shape: f32[32,128], index: 5, kind: output, shape index: {}]
  %s6 = sld [smem:[#allocation0]]
  $region42: #{tpu_custom_call.1} parent=0
    _
  %s8 = ssub.s32 1, %s6
  %s9 = scalar_select 0, %s8, %s6
  $region1: #{tpu_custom_call.1} parent=0
    #allocation3 [shape = 'u8[16384]{0}', space=vmem, size = 0x4000, scoped, tag = 'input window, operand 3, single buffered']
    #allocation4 [shape = 's32[1]{0}', space=sflag, size = 0x4, scoped, tag = 'scoped memory for tpu_custom_call.1']
    #allocation5 [shape = 's32[1]{0}', space=sflag, size = 0x4, scoped, tag = 'scoped memory for tpu_custom_call.1']
    #allocation6 [shape = 'u8[16384]{0}', space=vmem, size = 0x4000, scoped, tag = 'output window, operand 0, single buffered']
    %10 = vsyncpa [#allocation4], 0
    %11 = vsyncpa [#allocation5], 0
    // Predicated region
    $region2: #{tpu_custom_call.1} parent=1 // pred_check
      _
    $region3: #{tpu_custom_call.1} parent=1 // pred_check_branch
      %13 = sbr.rel (0) target = $region5
    $region4: #{tpu_custom_call.1} parent=1 // pred_region
      _
    $region5: #{tpu_custom_call.1} parent=1 // pred_fallthru
      _
    // Predicated region
    $region6: #{tpu_custom_call.1} parent=1 // pred_check
      _
    $region7: #{tpu_custom_call.1} parent=1 // pred_check_branch
      %15 = sbr.rel (0) target = $region9
    $region8: #{tpu_custom_call.1} parent=1 // pred_region
      _
    $region9: #{tpu_custom_call.1} parent=1 // pred_fallthru
      _
    // Predicated region
    $region10: #{tpu_custom_call.1} parent=1 // pred_check
      _
    $region11: #{tpu_custom_call.1} parent=1 // pred_check_branch
      %17 = sbr.rel (0) target = $region13
    $region12: #{tpu_custom_call.1} parent=1 // pred_region
      _
    $region13: #{tpu_custom_call.1} parent=1 // pred_fallthru
      _
    // Predicated region
    $region14: #{tpu_custom_call.1} parent=1 // pred_check
      _
    $region15: #{tpu_custom_call.1} parent=1 // pred_check_branch
      %19 = sbr.rel (0) target = $region17
    $region16: #{tpu_custom_call.1} parent=1 // pred_region
      %s21 = ssub.s32 512, 512
      %22 = vsyncadd [#allocation4], %s21
      %s23 = sshll.u32 [#allocation3], 4
      %s24 = int_to_ptr.vmem [resolvable:$true] %s23
      %29 = dma.hbm_to_vmem [thread:$0]  %s3, 512, %s24, [#allocation4], 128, 128, 8
    $region17: #{tpu_custom_call.1} parent=1 // pred_fallthru
      _
    // Predicated region
    $region18: #{tpu_custom_call.1} parent=1 // pred_check
      _
    $region19: #{tpu_custom_call.1} parent=1 // pred_check_branch
      %31 = sbr.rel (0) target = $region21
    $region20: #{tpu_custom_call.1} parent=1 // pred_region
      _
    $region21: #{tpu_custom_call.1} parent=1 // pred_fallthru
      _
    // Predicated region
    $region22: #{tpu_custom_call.1} parent=1 // pred_check
      _
    $region23: #{tpu_custom_call.1} parent=1 // pred_check_branch
      %33 = sbr.rel (0) target = $region25
    $region24: #{tpu_custom_call.1} parent=1 // pred_region
      %34 = dma.done [#allocation4], 512
    $region25: #{tpu_custom_call.1} parent=1 // pred_fallthru
      _
    %p35 = scmp.eq.s32.totalorder 0, 0
    // Predicated region
    $region26: #{tpu_custom_call.1} parent=1 // pred_check
      %p36 = pneg %p35
    $region27: #{tpu_custom_call.1} parent=1 // pred_check_branch
      %38 = sbr.rel (%p36) target = $region29
    $region28: #{tpu_custom_call.1} parent=1 // pred_region
      %vm39 = vcmask 130048
      %40 = vst.msk [vmem:[#allocation2] sm:$0xff] %vm39, 0.0
      %41 = vst.msk [vmem:[#allocation2 + $0x8] sm:$0xff] %vm39, 0.0
      %42 = vst.msk [vmem:[#allocation2 + $0x10] sm:$0xff] %vm39, 0.0
      %43 = vst.msk [vmem:[#allocation2 + $0x18] sm:$0xff] %vm39, 0.0
    $region29: #{tpu_custom_call.1} parent=1 // pred_fallthru
      _
    %v44 = vld [vmem:[%s0] sm:$0xff]
    %v45 = vld [vmem:[%s0 + $0x8] sm:$0xff]
    %v46 = vld [vmem:[%s0 + $0x10] sm:$0xff]
    %v47 = vld [vmem:[%s0 + $0x18] sm:$0xff]
    %v48 = vld [vmem:[%s1] sm:$0xff]
    %v49 = vld [vmem:[%s1 + $0x8] sm:$0xff]
    %v50 = vld [vmem:[%s1 + $0x10] sm:$0xff]
    %v51 = vld [vmem:[%s1 + $0x18] sm:$0xff]
    %v52 = vld [vmem:[#allocation2] sm:$0xff]
    %v53 = vld [vmem:[#allocation2 + $0x8] sm:$0xff]
    %v54 = vld [vmem:[#allocation2 + $0x10] sm:$0xff]
    %v55 = vld [vmem:[#allocation2 + $0x18] sm:$0xff]
    %vm56 = vcmask 261120
    %v58 = vsel %vm56, %v44, 0
    %v61 = vsel %vm56, %v45, 0
    %v64 = vsel %vm56, %v46, 0
    %v67 = vsel %vm56, %v47, 0
    %69 = vmatprep.subr.mxu0 0.0
    %70 = vmatpush1.msra.mxu0 %v48
    %71 = vmatprep.subr.mxu0 0.0
    %72 = vmatpush1.msra.mxu0 %v49
    %73 = vmatprep.subr.mxu0 0.0
    %74 = vmatpush1.msra.mxu0 %v50
    %75 = vmatprep.subr.mxu0 0.0
    %76 = vmatpush1.msra.mxu0 %v51
    %77 = vmatprep.subr.mxu0 0.0
    %78 = vmatpush1.msra.mxu0 0.0
    %79 = vmatprep.subr.mxu0 0.0
    %80 = vmatpush1.msra.mxu0 0.0
    %81 = vmatprep.subr.mxu0 0.0
    %82 = vmatpush1.msra.mxu0 0.0
    %83 = vmatprep.subr.mxu0 0.0
    %84 = vmatpush1.msra.mxu0 0.0
    %85 = vmatprep.subr.mxu0 0.0
    %86 = vmatpush1.msra.mxu0 0.0
    %87 = vmatprep.subr.mxu0 0.0
    %88 = vmatpush1.msra.mxu0 0.0
    %89 = vmatprep.subr.mxu0 0.0
    %90 = vmatpush1.msra.mxu0 0.0
    %91 = vmatprep.subr.mxu0 0.0
    %92 = vmatpush1.msra.mxu0 0.0
    %93 = vmatprep.subr.mxu0 0.0
    %94 = vmatpush1.msra.mxu0 0.0
    %95 = vmatprep.subr.mxu0 0.0
    %96 = vmatpush1.msra.mxu0 0.0
    %97 = vmatprep.subr.mxu0 0.0
    %98 = vmatpush1.msra.mxu0 0.0
    %99 = vmatprep.subr.mxu0 0.0
    %100 = vmatpush1.msra.mxu0 0.0
    %101 = vmatprep.subr.mxu0 0.0
    %102 = vmatpush1.msra.mxu0 0.0
    %103 = vmatprep.subr.mxu0 0.0
    %104 = vmatpush1.msra.mxu0 0.0
    %105 = vmatprep.subr.mxu0 0.0
    %106 = vmatpush1.msra.mxu0 0.0
    %107 = vmatprep.subr.mxu0 0.0
    %108 = vmatpush1.msra.mxu0 0.0
    %109 = vmatprep.subr.mxu0 0.0
    %110 = vmatpush1.msra.mxu0 0.0
    %111 = vmatprep.subr.mxu0 0.0
    %112 = vmatpush1.msra.mxu0 0.0
    %113 = vmatprep.subr.mxu0 0.0
    %114 = vmatpush1.msra.mxu0 0.0
    %115 = vmatprep.subr.mxu0 0.0
    %116 = vmatpush1.msra.mxu0 0.0
    %117 = vmatprep.subr.mxu0 0.0
    %118 = vmatpush1.msra.mxu0 0.0
    %119 = vmatprep.subr.mxu0 0.0
    %120 = vmatpush1.msra.mxu0 0.0
    %121 = vmatprep.subr.mxu0 0.0
    %122 = vmatpush1.msra.mxu0 0.0
    %123 = vmatprep.subr.mxu0 0.0
    %124 = vmatpush1.msra.mxu0 0.0
    %125 = vmatprep.subr.mxu0 0.0
    %126 = vmatpush1.msra.mxu0 0.0
    %127 = vmatprep.subr.mxu0 0.0
    %128 = vmatpush1.msra.mxu0 0.0
    %129 = vmatprep.subr.mxu0 0.0
    %130 = vmatpush1.msra.mxu0 0.0
    %131 = vmatprep.subr.mxu0 0.0
    %132 = vmatpush1.msra.mxu0 0.0
    %133 = vmatprep.mubr.f32.mxu0 0.0
    %134 = vmatmul.mubr.f32.gmra.mrb[0].mxu0 %v58
    %v135 = vpop.f32.mrb[0].mxu0
    %v136 = vadd.f32 0.0, %v135
    %v137 = vpop.f32.mrb[0].mxu0
    %138 = vmatprep.mubr.f32.mxu0 0.0
    %139 = vmatmul.mubr.f32.gmra.mrb[0].mxu0 %v61
    %v140 = vpop.f32.mrb[0].mxu0
    %v141 = vadd.f32 0.0, %v140
    %v142 = vpop.f32.mrb[0].mxu0
    %143 = vmatprep.mubr.f32.mxu0 0.0
    %144 = vmatmul.mubr.f32.gmra.mrb[0].mxu0 %v64
    %v145 = vpop.f32.mrb[0].mxu0
    %v146 = vadd.f32 0.0, %v145
    %v147 = vpop.f32.mrb[0].mxu0
    %148 = vmatprep.mubr.f32.mxu0 0.0
    %149 = vmatmul.mubr.f32.gmra.mrb[0].mxu0 %v67
    %v150 = vpop.f32.mrb[0].mxu0
    %v151 = vadd.f32 0.0, %v150
    %v152 = vpop.f32.mrb[0].mxu0
    %153 = vdwg.mxu0
    %v154 = vadd.f32 %v52, %v136
    %v155 = vadd.f32 %v53, %v141
    %v156 = vadd.f32 %v54, %v146
    %v157 = vadd.f32 %v55, %v151
    %vm158 = vcmask 130048
    %159 = vst.msk [vmem:[#allocation2] sm:$0xff] %vm158, %v154
    %160 = vst.msk [vmem:[#allocation2 + $0x8] sm:$0xff] %vm158, %v155
    %161 = vst.msk [vmem:[#allocation2 + $0x10] sm:$0xff] %vm158, %v156
    %162 = vst.msk [vmem:[#allocation2 + $0x18] sm:$0xff] %vm158, %v157
    // Predicated region
    $region30: #{tpu_custom_call.1} parent=1 // pred_check
      %p163 = pneg %p35
    $region31: #{tpu_custom_call.1} parent=1 // pred_check_branch
      %165 = sbr.rel (%p163) target = $region33
    $region32: #{tpu_custom_call.1} parent=1 // pred_region
      %v166 = vld [vmem:[#allocation2] sm:$0xff]
      %v167 = vld [vmem:[#allocation2 + $0x8] sm:$0xff]
      %v168 = vld [vmem:[#allocation2 + $0x10] sm:$0xff]
      %v169 = vld [vmem:[#allocation2 + $0x18] sm:$0xff]
      %v170 = vld [vmem:[%s2] sm:$0xff]
      %v171 = vld [vmem:[%s2 + $0x8] sm:$0xff]
      %v173 = vsel %vm158, %v166, 0
      %v176 = vsel %vm158, %v167, 0
      %v179 = vsel %vm158, %v168, 0
      %v182 = vsel %vm158, %v169, 0
      %184 = vmatprep.subr.mxu0 0.0
      %185 = vmatpush1.msra.mxu0 %v170
      %186 = vmatprep.subr.mxu0 0.0
      %187 = vmatpush1.msra.mxu0 %v171
      %188 = vmatprep.subr.mxu0 0.0
      %189 = vmatpush1.msra.mxu0 0.0
      %190 = vmatprep.subr.mxu0 0.0
      %191 = vmatpush1.msra.mxu0 0.0
      %192 = vmatprep.subr.mxu0 0.0
      %193 = vmatpush1.msra.mxu0 0.0
      %194 = vmatprep.subr.mxu0 0.0
      %195 = vmatpush1.msra.mxu0 0.0
      %196 = vmatprep.subr.mxu0 0.0
      %197 = vmatpush1.msra.mxu0 0.0
      %198 = vmatprep.subr.mxu0 0.0
      %199 = vmatpush1.msra.mxu0 0.0
      %200 = vmatprep.subr.mxu0 0.0
      %201 = vmatpush1.msra.mxu0 0.0
      %202 = vmatprep.subr.mxu0 0.0
      %203 = vmatpush1.msra.mxu0 0.0
      %204 = vmatprep.subr.mxu0 0.0
      %205 = vmatpush1.msra.mxu0 0.0
      %206 = vmatprep.subr.mxu0 0.0
      %207 = vmatpush1.msra.mxu0 0.0
      %208 = vmatprep.subr.mxu0 0.0
      %209 = vmatpush1.msra.mxu0 0.0
      %210 = vmatprep.subr.mxu0 0.0
      %211 = vmatpush1.msra.mxu0 0.0
      %212 = vmatprep.subr.mxu0 0.0
      %213 = vmatpush1.msra.mxu0 0.0
      %214 = vmatprep.subr.mxu0 0.0
      %215 = vmatpush1.msra.mxu0 0.0
      %216 = vmatprep.subr.mxu0 0.0
      %217 = vmatpush1.msra.mxu0 0.0
      %218 = vmatprep.subr.mxu0 0.0
      %219 = vmatpush1.msra.mxu0 0.0
      %220 = vmatprep.subr.mxu0 0.0
      %221 = vmatpush1.msra.mxu0 0.0
      %222 = vmatprep.subr.mxu0 0.0
      %223 = vmatpush1.msra.mxu0 0.0
      %224 = vmatprep.subr.mxu0 0.0
      %225 = vmatpush1.msra.mxu0 0.0
      %226 = vmatprep.subr.mxu0 0.0
      %227 = vmatpush1.msra.mxu0 0.0
      %228 = vmatprep.subr.mxu0 0.0
      %229 = vmatpush1.msra.mxu0 0.0
      %230 = vmatprep.subr.mxu0 0.0
      %231 = vmatpush1.msra.mxu0 0.0
      %232 = vmatprep.subr.mxu0 0.0
      %233 = vmatpush1.msra.mxu0 0.0
      %234 = vmatprep.subr.mxu0 0.0
      %235 = vmatpush1.msra.mxu0 0.0
      %236 = vmatprep.subr.mxu0 0.0
      %237 = vmatpush1.msra.mxu0 0.0
      %238 = vmatprep.subr.mxu0 0.0
      %239 = vmatpush1.msra.mxu0 0.0
      %240 = vmatprep.subr.mxu0 0.0
      %241 = vmatpush1.msra.mxu0 0.0
      %242 = vmatprep.subr.mxu0 0.0
      %243 = vmatpush1.msra.mxu0 0.0
      %244 = vmatprep.subr.mxu0 0.0
      %245 = vmatpush1.msra.mxu0 0.0
      %246 = vmatprep.subr.mxu0 0.0
      %247 = vmatpush1.msra.mxu0 0.0
      %248 = vmatprep.mubr.f32.mxu0 0.0
      %249 = vmatmul.mubr.f32.gmra.mrb[0].mxu0 %v173
      %v250 = vpop.f32.mrb[0].mxu0
      %v251 = vadd.f32 0.0, %v250
      %v252 = vpop.f32.mrb[0].mxu0
      %253 = vmatprep.mubr.f32.mxu0 0.0
      %254 = vmatmul.mubr.f32.gmra.mrb[0].mxu0 %v176
      %v255 = vpop.f32.mrb[0].mxu0
      %v256 = vadd.f32 0.0, %v255
      %v257 = vpop.f32.mrb[0].mxu0
      %258 = vmatprep.mubr.f32.mxu0 0.0
      %259 = vmatmul.mubr.f32.gmra.mrb[0].mxu0 %v179
      %v260 = vpop.f32.mrb[0].mxu0
      %v261 = vadd.f32 0.0, %v260
      %v262 = vpop.f32.mrb[0].mxu0
      %263 = vmatprep.mubr.f32.mxu0 0.0
      %264 = vmatmul.mubr.f32.gmra.mrb[0].mxu0 %v182
      %v265 = vpop.f32.mrb[0].mxu0
      %v266 = vadd.f32 0.0, %v265
      %v267 = vpop.f32.mrb[0].mxu0
      %268 = vdwg.mxu0
      %v269 = vmax.f32 %v251, 0.0
      %v270 = vmax.f32 %v256, 0.0
      %v271 = vmax.f32 %v261, 0.0
      %v272 = vmax.f32 %v266, 0.0
      %v273 = vld [vmem:[#allocation3] sm:$0xff]
      %v274 = vld [vmem:[#allocation3 + $0x8] sm:$0xff]
      %v275 = vld [vmem:[#allocation3 + $0x10] sm:$0xff]
      %v276 = vld [vmem:[#allocation3 + $0x18] sm:$0xff]
      %v277 = vld [vmem:[%s4] sm:$0x1]
      %v279 = vlaneseq
      %v280 = vshrl.u32 %v279, 7
      %v281 = vsub.s32 0, %v280
      %v282 = vrot.slane %v277, %v281
      %v285 = vsel %vm56, %v269, 0
      %v288 = vsel %vm56, %v270, 0
      %v291 = vsel %vm56, %v271, 0
      %v294 = vsel %vm56, %v272, 0
      %296 = vmatprep.subr.mxu0 0.0
      %297 = vmatpush1.msra.mxu0 %v273
      %298 = vmatprep.subr.mxu0 0.0
      %299 = vmatpush1.msra.mxu0 %v274
      %300 = vmatprep.subr.mxu0 0.0
      %301 = vmatpush1.msra.mxu0 %v275
      %302 = vmatprep.subr.mxu0 0.0
      %303 = vmatpush1.msra.mxu0 %v276
      %304 = vmatprep.subr.mxu0 0.0
      %305 = vmatpush1.msra.mxu0 0.0
      %306 = vmatprep.subr.mxu0 0.0
      %307 = vmatpush1.msra.mxu0 0.0
      %308 = vmatprep.subr.mxu0 0.0
      %309 = vmatpush1.msra.mxu0 0.0
      %310 = vmatprep.subr.mxu0 0.0
      %311 = vmatpush1.msra.mxu0 0.0
      %312 = vmatprep.subr.mxu0 0.0
      %313 = vmatpush1.msra.mxu0 0.0
      %314 = vmatprep.subr.mxu0 0.0
      %315 = vmatpush1.msra.mxu0 0.0
      %316 = vmatprep.subr.mxu0 0.0
      %317 = vmatpush1.msra.mxu0 0.0
      %318 = vmatprep.subr.mxu0 0.0
      %319 = vmatpush1.msra.mxu0 0.0
      %320 = vmatprep.subr.mxu0 0.0
      %321 = vmatpush1.msra.mxu0 0.0
      %322 = vmatprep.subr.mxu0 0.0
      %323 = vmatpush1.msra.mxu0 0.0
      %324 = vmatprep.subr.mxu0 0.0
      %325 = vmatpush1.msra.mxu0 0.0
      %326 = vmatprep.subr.mxu0 0.0
      %327 = vmatpush1.msra.mxu0 0.0
      %328 = vmatprep.subr.mxu0 0.0
      %329 = vmatpush1.msra.mxu0 0.0
      %330 = vmatprep.subr.mxu0 0.0
      %331 = vmatpush1.msra.mxu0 0.0
      %332 = vmatprep.subr.mxu0 0.0
      %333 = vmatpush1.msra.mxu0 0.0
      %334 = vmatprep.subr.mxu0 0.0
      %335 = vmatpush1.msra.mxu0 0.0
      %336 = vmatprep.subr.mxu0 0.0
      %337 = vmatpush1.msra.mxu0 0.0
      %338 = vmatprep.subr.mxu0 0.0
      %339 = vmatpush1.msra.mxu0 0.0
      %340 = vmatprep.subr.mxu0 0.0
      %341 = vmatpush1.msra.mxu0 0.0
      %342 = vmatprep.subr.mxu0 0.0
      %343 = vmatpush1.msra.mxu0 0.0
      %344 = vmatprep.subr.mxu0 0.0
      %345 = vmatpush1.msra.mxu0 0.0
      %346 = vmatprep.subr.mxu0 0.0
      %347 = vmatpush1.msra.mxu0 0.0
      %348 = vmatprep.subr.mxu0 0.0
      %349 = vmatpush1.msra.mxu0 0.0
      %350 = vmatprep.subr.mxu0 0.0
      %351 = vmatpush1.msra.mxu0 0.0
      %352 = vmatprep.subr.mxu0 0.0
      %353 = vmatpush1.msra.mxu0 0.0
      %354 = vmatprep.subr.mxu0 0.0
      %355 = vmatpush1.msra.mxu0 0.0
      %356 = vmatprep.subr.mxu0 0.0
      %357 = vmatpush1.msra.mxu0 0.0
      %358 = vmatprep.subr.mxu0 0.0
      %359 = vmatpush1.msra.mxu0 0.0
      %360 = vmatprep.mubr.f32.mxu0 0.0
      %361 = vmatmul.mubr.f32.gmra.mrb[0].mxu0 %v285
      %v362 = vpop.f32.mrb[0].mxu0
      %v363 = vadd.f32 %v282, %v362
      %v364 = vpop.f32.mrb[0].mxu0
      %365 = vmatprep.mubr.f32.mxu0 0.0
      %366 = vmatmul.mubr.f32.gmra.mrb[0].mxu0 %v288
      %v367 = vpop.f32.mrb[0].mxu0
      %v368 = vadd.f32 %v282, %v367
      %v369 = vpop.f32.mrb[0].mxu0
      %370 = vmatprep.mubr.f32.mxu0 0.0
      %371 = vmatmul.mubr.f32.gmra.mrb[0].mxu0 %v291
      %v372 = vpop.f32.mrb[0].mxu0
      %v373 = vadd.f32 %v282, %v372
      %v374 = vpop.f32.mrb[0].mxu0
      %375 = vmatprep.mubr.f32.mxu0 0.0
      %376 = vmatmul.mubr.f32.gmra.mrb[0].mxu0 %v294
      %v377 = vpop.f32.mrb[0].mxu0
      %v378 = vadd.f32 %v282, %v377
      %v379 = vpop.f32.mrb[0].mxu0
      %380 = vdwg.mxu0
      %v381 = vlaneseq
      %v382 = vand.u32 %v381, 127
      %vm383 = vcmp.lt.s32.totalorder %v382, 8
      %v384 = vsel %vm383, %v363, -inf
      %v385 = vsel %vm383, %v368, -inf
      %v386 = vsel %vm383, %v373, -inf
      %v387 = vsel %vm383, %v378, -inf
      %v388 = vsel %vm383, %v363, inf
      %v389 = vsel %vm383, %v368, inf
      %v390 = vsel %vm383, %v373, inf
      %v391 = vsel %vm383, %v378, inf
      %392 = vmax.xlane.f32.xlu0 %v384
      %v393 = vpop.xlane.xlu0 %392
      %394 = vmax.xlane.f32.xlu0 %v385
      %v395 = vpop.xlane.xlu0 %394
      %396 = vmax.xlane.f32.xlu0 %v386
      %v397 = vpop.xlane.xlu0 %396
      %398 = vmax.xlane.f32.xlu0 %v387
      %v399 = vpop.xlane.xlu0 %398
      %400 = vmin.xlane.f32.xlu0 %v388
      %v401 = vpop.xlane.xlu0 %400
      %402 = vmin.xlane.f32.xlu0 %v389
      %v403 = vpop.xlane.xlu0 %402
      %404 = vmin.xlane.f32.xlu0 %v390
      %v405 = vpop.xlane.xlu0 %404
      %406 = vmin.xlane.f32.xlu0 %v391
      %v407 = vpop.xlane.xlu0 %406
      %v408 = vsub.f32 %v393, %v401
      %v409 = vsub.f32 %v395, %v403
      %v410 = vsub.f32 %v397, %v405
      %v411 = vsub.f32 %v399, %v407
      %v412 = vsub.f32 %v363, %v401
      %v413 = vsub.f32 %v368, %v403
      %v414 = vsub.f32 %v373, %v405
      %v415 = vsub.f32 %v378, %v407
      %v416 = vrcp.pop %v408
      %v417 = vmul.f32 %v412, %v416
      %v418 = vrcp.pop %v409
      %v419 = vmul.f32 %v413, %v418
      %v420 = vrcp.pop %v410
      %v421 = vmul.f32 %v414, %v420
      %v422 = vrcp.pop %v411
      %v423 = vmul.f32 %v415, %v422
      %v424 = vmul.f32 %v417, %v417
      %v425 = vmul.f32 %v419, %v419
      %v426 = vmul.f32 %v421, %v421
      %v427 = vmul.f32 %v423, %v423
      %v428 = vsel %vm383, %v424, 0.0
      %v429 = vsel %vm383, %v425, 0.0
      %v430 = vsel %vm383, %v426, 0.0
      %v431 = vsel %vm383, %v427, 0.0
      %432 = vadd.xlane.f32.xlu0 %v428
      %v433 = vpop.xlane.xlu0 %432
      %434 = vadd.xlane.f32.xlu0 %v429
      %v435 = vpop.xlane.xlu0 %434
      %436 = vadd.xlane.f32.xlu0 %v430
      %v437 = vpop.xlane.xlu0 %436
      %438 = vadd.xlane.f32.xlu0 %v431
      %v439 = vpop.xlane.xlu0 %438
      %v440 = vrsqrt.pop %v433
      %v441 = vmul.f32 %v433, %v440
      %vm442 = vcmp.eq.f32.partialorder %v433, inf
      %v443 = vsel %vm442, %v433, %v441
      %vm444 = vcmp.eq.f32.partialorder %v433, 0.0
      %v445 = vand.u32 %v433, 2147483648
      %v446 = vsel %vm444, %v445, %v443
      %v447 = vrsqrt.pop %v435
      %v448 = vmul.f32 %v435, %v447
      %vm449 = vcmp.eq.f32.partialorder %v435, inf
      %v450 = vsel %vm449, %v435, %v448
      %vm451 = vcmp.eq.f32.partialorder %v435, 0.0
      %v452 = vand.u32 %v435, 2147483648
      %v453 = vsel %vm451, %v452, %v450
      %v454 = vrsqrt.pop %v437
      %v455 = vmul.f32 %v437, %v454
      %vm456 = vcmp.eq.f32.partialorder %v437, inf
      %v457 = vsel %vm456, %v437, %v455
      %vm458 = vcmp.eq.f32.partialorder %v437, 0.0
      %v459 = vand.u32 %v437, 2147483648
      %v460 = vsel %vm458, %v459, %v457
      %v461 = vrsqrt.pop %v439
      %v462 = vmul.f32 %v439, %v461
      %vm463 = vcmp.eq.f32.partialorder %v439, inf
      %v464 = vsel %vm463, %v439, %v462
      %vm465 = vcmp.eq.f32.partialorder %v439, 0.0
      %v466 = vand.u32 %v439, 2147483648
      %v467 = vsel %vm465, %v466, %v464
      %v468 = vmax.f32 %v446, 1e-12
      %v469 = vmax.f32 %v453, 1e-12
      %v470 = vmax.f32 %v460, 1e-12
      %v471 = vmax.f32 %v467, 1e-12
      %v472 = vrcp.pop %v468
      %v473 = vmul.f32 %v417, %v472
      %v474 = vrcp.pop %v469
      %v475 = vmul.f32 %v419, %v474
      %v476 = vrcp.pop %v470
      %v477 = vmul.f32 %v421, %v476
      %v478 = vrcp.pop %v471
      %v479 = vmul.f32 %v423, %v478
      %480 = vst [vmem:[#allocation6] sm:$0xff] %v473
      %481 = vst [vmem:[#allocation6 + $0x8] sm:$0xff] %v475
      %482 = vst [vmem:[#allocation6 + $0x10] sm:$0xff] %v477
      %483 = vst [vmem:[#allocation6 + $0x18] sm:$0xff] %v479
    $region33: #{tpu_custom_call.1} parent=1 // pred_fallthru
      _
    // Predicated region
    $region34: #{tpu_custom_call.1} parent=1 // pred_check
      _
    $region35: #{tpu_custom_call.1} parent=1 // pred_check_branch
      %485 = sbr.rel (0) target = $region37
    $region36: #{tpu_custom_call.1} parent=1 // pred_region
      %s487 = ssub.s32 512, 512
      %488 = vsyncadd [#allocation5], %s487
      %s489 = sshll.u32 [#allocation6], 4
      %s490 = int_to_ptr.vmem [resolvable:$true] %s489
      %495 = dma.vmem_to_hbm [thread:$0]  %s490, 512, %s5, [#allocation5], 128, 128, 8
    $region37: #{tpu_custom_call.1} parent=1 // pred_fallthru
      _
    // Predicated region
    $region38: #{tpu_custom_call.1} parent=1 // pred_check
      _
    $region39: #{tpu_custom_call.1} parent=1 // pred_check_branch
      %497 = sbr.rel (0) target = $region41
    $region40: #{tpu_custom_call.1} parent=1 // pred_region
      %498 = dma.done [#allocation5], 512
    $region41: #{tpu_custom_call.1} parent=1 // pred_fallthru
      _
    %499 = vsyncpa [#allocation4], 1
    %500 = vsyncpa [#allocation5], 1

// kernel: tpu_custom_call.1
$region0: #{tpu_custom_call.1}
  #allocation0 [shape = 'u32[]', space=smem, size = 0x4, offset = 0x4, fixed_abs, tag = 'smem constant byte address 0x4 - core index']
  #allocation1 [shape = 'u32[144,128]{1,0:T(1,128)}', space=vmem, size = 0x12000, scoped, tag = 'internal scratch']
  #allocation2 [shape = 'f32[32,16]{1,0:T(8,128)}', space=vmem, size = 0x4000, scoped, tag = 'scratch operand']
  %s0 = inlined_call_operand.vmem [shape: f32[32,32], index: 0, kind: input, shape index: {}]
  %s1 = inlined_call_operand.vmem [shape: f32[32,16], index: 1, kind: input, shape index: {}]
  %s2 = inlined_call_operand.vmem [shape: f32[16,32], index: 2, kind: input, shape index: {}]
  %s3 = inlined_call_operand.hbm [shape: f32[32,128], index: 3, kind: input, shape index: {}]
  %s4 = inlined_call_operand.vmem [shape: f32[1,128], index: 4, kind: input, shape index: {}]
  %s5 = inlined_call_operand.hbm [shape: f32[32,128], index: 5, kind: output, shape index: {}]
  %s6 = sld [smem:[#allocation0]]
  $region42: #{tpu_custom_call.1} parent=0
    _
  %s8 = ssub.s32 1, %s6
  %s9 = scalar_select 0, %s8, %s6
  $region1: #{tpu_custom_call.1} parent=0
    #allocation3 [shape = 'u8[16384]{0}', space=vmem, size = 0x4000, scoped, tag = 'input window, operand 3, single buffered']
    #allocation4 [shape = 's32[1]{0}', space=sflag, size = 0x4, scoped, tag = 'scoped memory for tpu_custom_call.1']
    #allocation5 [shape = 's32[1]{0}', space=sflag, size = 0x4, scoped, tag = 'scoped memory for tpu_custom_call.1']
    #allocation6 [shape = 'u8[16384]{0}', space=vmem, size = 0x4000, scoped, tag = 'output window, operand 0, single buffered']
    %10 = vsyncpa [#allocation4], 0
    %11 = vsyncpa [#allocation5], 0
    // Predicated region
    $region2: #{tpu_custom_call.1} parent=1 // pred_check
      _
    $region3: #{tpu_custom_call.1} parent=1 // pred_check_branch
      %13 = sbr.rel (0) target = $region5
    $region4: #{tpu_custom_call.1} parent=1 // pred_region
      _
    $region5: #{tpu_custom_call.1} parent=1 // pred_fallthru
      _
    // Predicated region
    $region6: #{tpu_custom_call.1} parent=1 // pred_check
      _
    $region7: #{tpu_custom_call.1} parent=1 // pred_check_branch
      %15 = sbr.rel (0) target = $region9
    $region8: #{tpu_custom_call.1} parent=1 // pred_region
      _
    $region9: #{tpu_custom_call.1} parent=1 // pred_fallthru
      _
    // Predicated region
    $region10: #{tpu_custom_call.1} parent=1 // pred_check
      _
    $region11: #{tpu_custom_call.1} parent=1 // pred_check_branch
      %17 = sbr.rel (0) target = $region13
    $region12: #{tpu_custom_call.1} parent=1 // pred_region
      _
    $region13: #{tpu_custom_call.1} parent=1 // pred_fallthru
      _
    // Predicated region
    $region14: #{tpu_custom_call.1} parent=1 // pred_check
      _
    $region15: #{tpu_custom_call.1} parent=1 // pred_check_branch
      %19 = sbr.rel (0) target = $region17
    $region16: #{tpu_custom_call.1} parent=1 // pred_region
      %s21 = ssub.s32 512, 512
      %22 = vsyncadd [#allocation4], %s21
      %s23 = sshll.u32 [#allocation3], 4
      %s24 = int_to_ptr.vmem [resolvable:$true] %s23
      %29 = dma.hbm_to_vmem [thread:$0]  %s3, 512, %s24, [#allocation4], 128, 128, 8
    $region17: #{tpu_custom_call.1} parent=1 // pred_fallthru
      _
    // Predicated region
    $region18: #{tpu_custom_call.1} parent=1 // pred_check
      _
    $region19: #{tpu_custom_call.1} parent=1 // pred_check_branch
      %31 = sbr.rel (0) target = $region21
    $region20: #{tpu_custom_call.1} parent=1 // pred_region
      _
    $region21: #{tpu_custom_call.1} parent=1 // pred_fallthru
      _
    // Predicated region
    $region22: #{tpu_custom_call.1} parent=1 // pred_check
      _
    $region23: #{tpu_custom_call.1} parent=1 // pred_check_branch
      %33 = sbr.rel (0) target = $region25
    $region24: #{tpu_custom_call.1} parent=1 // pred_region
      %34 = dma.done [#allocation4], 512
    $region25: #{tpu_custom_call.1} parent=1 // pred_fallthru
      _
    %p35 = scmp.eq.s32.totalorder 0, 0
    // Predicated region
    $region26: #{tpu_custom_call.1} parent=1 // pred_check
      %p36 = pneg %p35
    $region27: #{tpu_custom_call.1} parent=1 // pred_check_branch
      %38 = sbr.rel (%p36) target = $region29
    $region28: #{tpu_custom_call.1} parent=1 // pred_region
      %vm39 = vcmask 130048
      %40 = vst.msk [vmem:[#allocation2] sm:$0xff] %vm39, 0.0
      %41 = vst.msk [vmem:[#allocation2 + $0x8] sm:$0xff] %vm39, 0.0
      %42 = vst.msk [vmem:[#allocation2 + $0x10] sm:$0xff] %vm39, 0.0
      %43 = vst.msk [vmem:[#allocation2 + $0x18] sm:$0xff] %vm39, 0.0
    $region29: #{tpu_custom_call.1} parent=1 // pred_fallthru
      _
    %v44 = vld [vmem:[%s0] sm:$0xff]
    %v45 = vld [vmem:[%s0 + $0x8] sm:$0xff]
    %v46 = vld [vmem:[%s0 + $0x10] sm:$0xff]
    %v47 = vld [vmem:[%s0 + $0x18] sm:$0xff]
    %v48 = vld [vmem:[%s1] sm:$0xff]
    %v49 = vld [vmem:[%s1 + $0x8] sm:$0xff]
    %v50 = vld [vmem:[%s1 + $0x10] sm:$0xff]
    %v51 = vld [vmem:[%s1 + $0x18] sm:$0xff]
    %v52 = vld [vmem:[#allocation2] sm:$0xff]
    %v53 = vld [vmem:[#allocation2 + $0x8] sm:$0xff]
    %v54 = vld [vmem:[#allocation2 + $0x10] sm:$0xff]
    %v55 = vld [vmem:[#allocation2 + $0x18] sm:$0xff]
    %vm56 = vcmask 261120
    %v58 = vsel %vm56, %v44, 0
    %v61 = vsel %vm56, %v45, 0
    %v64 = vsel %vm56, %v46, 0
    %v67 = vsel %vm56, %v47, 0
    %69 = vmatprep.subr.mxu0 0.0
    %70 = vmatpush1.msra.mxu0 %v48
    %71 = vmatprep.subr.mxu0 0.0
    %72 = vmatpush1.msra.mxu0 %v49
    %73 = vmatprep.subr.mxu0 0.0
    %74 = vmatpush1.msra.mxu0 %v50
    %75 = vmatprep.subr.mxu0 0.0
    %76 = vmatpush1.msra.mxu0 %v51
    %77 = vmatprep.subr.mxu0 0.0
    %78 = vmatpush1.msra.mxu0 0.0
    %79 = vmatprep.subr.mxu0 0.0
    %80 = vmatpush1.msra.mxu0 0.0
    %81 = vmatprep.subr.mxu0 0.0
    %82 = vmatpush1.msra.mxu0 0.0
    %83 = vmatprep.subr.mxu0 0.0
    %84 = vmatpush1.msra.mxu0 0.0
    %85 = vmatprep.subr.mxu0 0.0
    %86 = vmatpush1.msra.mxu0 0.0
    %87 = vmatprep.subr.mxu0 0.0
    %88 = vmatpush1.msra.mxu0 0.0
    %89 = vmatprep.subr.mxu0 0.0
    %90 = vmatpush1.msra.mxu0 0.0
    %91 = vmatprep.subr.mxu0 0.0
    %92 = vmatpush1.msra.mxu0 0.0
    %93 = vmatprep.subr.mxu0 0.0
    %94 = vmatpush1.msra.mxu0 0.0
    %95 = vmatprep.subr.mxu0 0.0
    %96 = vmatpush1.msra.mxu0 0.0
    %97 = vmatprep.subr.mxu0 0.0
    %98 = vmatpush1.msra.mxu0 0.0
    %99 = vmatprep.subr.mxu0 0.0
    %100 = vmatpush1.msra.mxu0 0.0
    %101 = vmatprep.subr.mxu0 0.0
    %102 = vmatpush1.msra.mxu0 0.0
    %103 = vmatprep.subr.mxu0 0.0
    %104 = vmatpush1.msra.mxu0 0.0
    %105 = vmatprep.subr.mxu0 0.0
    %106 = vmatpush1.msra.mxu0 0.0
    %107 = vmatprep.subr.mxu0 0.0
    %108 = vmatpush1.msra.mxu0 0.0
    %109 = vmatprep.subr.mxu0 0.0
    %110 = vmatpush1.msra.mxu0 0.0
    %111 = vmatprep.subr.mxu0 0.0
    %112 = vmatpush1.msra.mxu0 0.0
    %113 = vmatprep.subr.mxu0 0.0
    %114 = vmatpush1.msra.mxu0 0.0
    %115 = vmatprep.subr.mxu0 0.0
    %116 = vmatpush1.msra.mxu0 0.0
    %117 = vmatprep.subr.mxu0 0.0
    %118 = vmatpush1.msra.mxu0 0.0
    %119 = vmatprep.subr.mxu0 0.0
    %120 = vmatpush1.msra.mxu0 0.0
    %121 = vmatprep.subr.mxu0 0.0
    %122 = vmatpush1.msra.mxu0 0.0
    %123 = vmatprep.subr.mxu0 0.0
    %124 = vmatpush1.msra.mxu0 0.0
    %125 = vmatprep.subr.mxu0 0.0
    %126 = vmatpush1.msra.mxu0 0.0
    %127 = vmatprep.subr.mxu0 0.0
    %128 = vmatpush1.msra.mxu0 0.0
    %129 = vmatprep.subr.mxu0 0.0
    %130 = vmatpush1.msra.mxu0 0.0
    %131 = vmatprep.subr.mxu0 0.0
    %132 = vmatpush1.msra.mxu0 0.0
    %133 = vmatprep.mubr.f32.mxu0 0.0
    %134 = vmatmul.mubr.f32.gmra.mrb[0].mxu0 %v58
    %v135 = vpop.f32.mrb[0].mxu0
    %v136 = vadd.f32 0.0, %v135
    %v137 = vpop.f32.mrb[0].mxu0
    %138 = vmatprep.mubr.f32.mxu0 0.0
    %139 = vmatmul.mubr.f32.gmra.mrb[0].mxu0 %v61
    %v140 = vpop.f32.mrb[0].mxu0
    %v141 = vadd.f32 0.0, %v140
    %v142 = vpop.f32.mrb[0].mxu0
    %143 = vmatprep.mubr.f32.mxu0 0.0
    %144 = vmatmul.mubr.f32.gmra.mrb[0].mxu0 %v64
    %v145 = vpop.f32.mrb[0].mxu0
    %v146 = vadd.f32 0.0, %v145
    %v147 = vpop.f32.mrb[0].mxu0
    %148 = vmatprep.mubr.f32.mxu0 0.0
    %149 = vmatmul.mubr.f32.gmra.mrb[0].mxu0 %v67
    %v150 = vpop.f32.mrb[0].mxu0
    %v151 = vadd.f32 0.0, %v150
    %v152 = vpop.f32.mrb[0].mxu0
    %153 = vdwg.mxu0
    %v154 = vadd.f32 %v52, %v136
    %v155 = vadd.f32 %v53, %v141
    %v156 = vadd.f32 %v54, %v146
    %v157 = vadd.f32 %v55, %v151
    %vm158 = vcmask 130048
    %159 = vst.msk [vmem:[#allocation2] sm:$0xff] %vm158, %v154
    %160 = vst.msk [vmem:[#allocation2 + $0x8] sm:$0xff] %vm158, %v155
    %161 = vst.msk [vmem:[#allocation2 + $0x10] sm:$0xff] %vm158, %v156
    %162 = vst.msk [vmem:[#allocation2 + $0x18] sm:$0xff] %vm158, %v157
    // Predicated region
    $region30: #{tpu_custom_call.1} parent=1 // pred_check
      %p163 = pneg %p35
    $region31: #{tpu_custom_call.1} parent=1 // pred_check_branch
      %165 = sbr.rel (%p163) target = $region33
    $region32: #{tpu_custom_call.1} parent=1 // pred_region
      %v166 = vld [vmem:[#allocation2] sm:$0xff]
      %v167 = vld [vmem:[#allocation2 + $0x8] sm:$0xff]
      %v168 = vld [vmem:[#allocation2 + $0x10] sm:$0xff]
      %v169 = vld [vmem:[#allocation2 + $0x18] sm:$0xff]
      %v170 = vld [vmem:[%s2] sm:$0xff]
      %v171 = vld [vmem:[%s2 + $0x8] sm:$0xff]
      %v173 = vsel %vm158, %v166, 0
      %v176 = vsel %vm158, %v167, 0
      %v179 = vsel %vm158, %v168, 0
      %v182 = vsel %vm158, %v169, 0
      %184 = vmatprep.subr.mxu0 0.0
      %185 = vmatpush1.msra.mxu0 %v170
      %186 = vmatprep.subr.mxu0 0.0
      %187 = vmatpush1.msra.mxu0 %v171
      %188 = vmatprep.subr.mxu0 0.0
      %189 = vmatpush1.msra.mxu0 0.0
      %190 = vmatprep.subr.mxu0 0.0
      %191 = vmatpush1.msra.mxu0 0.0
      %192 = vmatprep.subr.mxu0 0.0
      %193 = vmatpush1.msra.mxu0 0.0
      %194 = vmatprep.subr.mxu0 0.0
      %195 = vmatpush1.msra.mxu0 0.0
      %196 = vmatprep.subr.mxu0 0.0
      %197 = vmatpush1.msra.mxu0 0.0
      %198 = vmatprep.subr.mxu0 0.0
      %199 = vmatpush1.msra.mxu0 0.0
      %200 = vmatprep.subr.mxu0 0.0
      %201 = vmatpush1.msra.mxu0 0.0
      %202 = vmatprep.subr.mxu0 0.0
      %203 = vmatpush1.msra.mxu0 0.0
      %204 = vmatprep.subr.mxu0 0.0
      %205 = vmatpush1.msra.mxu0 0.0
      %206 = vmatprep.subr.mxu0 0.0
      %207 = vmatpush1.msra.mxu0 0.0
      %208 = vmatprep.subr.mxu0 0.0
      %209 = vmatpush1.msra.mxu0 0.0
      %210 = vmatprep.subr.mxu0 0.0
      %211 = vmatpush1.msra.mxu0 0.0
      %212 = vmatprep.subr.mxu0 0.0
      %213 = vmatpush1.msra.mxu0 0.0
      %214 = vmatprep.subr.mxu0 0.0
      %215 = vmatpush1.msra.mxu0 0.0
      %216 = vmatprep.subr.mxu0 0.0
      %217 = vmatpush1.msra.mxu0 0.0
      %218 = vmatprep.subr.mxu0 0.0
      %219 = vmatpush1.msra.mxu0 0.0
      %220 = vmatprep.subr.mxu0 0.0
      %221 = vmatpush1.msra.mxu0 0.0
      %222 = vmatprep.subr.mxu0 0.0
      %223 = vmatpush1.msra.mxu0 0.0
      %224 = vmatprep.subr.mxu0 0.0
      %225 = vmatpush1.msra.mxu0 0.0
      %226 = vmatprep.subr.mxu0 0.0
      %227 = vmatpush1.msra.mxu0 0.0
      %228 = vmatprep.subr.mxu0 0.0
      %229 = vmatpush1.msra.mxu0 0.0
      %230 = vmatprep.subr.mxu0 0.0
      %231 = vmatpush1.msra.mxu0 0.0
      %232 = vmatprep.subr.mxu0 0.0
      %233 = vmatpush1.msra.mxu0 0.0
      %234 = vmatprep.subr.mxu0 0.0
      %235 = vmatpush1.msra.mxu0 0.0
      %236 = vmatprep.subr.mxu0 0.0
      %237 = vmatpush1.msra.mxu0 0.0
      %238 = vmatprep.subr.mxu0 0.0
      %239 = vmatpush1.msra.mxu0 0.0
      %240 = vmatprep.subr.mxu0 0.0
      %241 = vmatpush1.msra.mxu0 0.0
      %242 = vmatprep.subr.mxu0 0.0
      %243 = vmatpush1.msra.mxu0 0.0
      %244 = vmatprep.subr.mxu0 0.0
      %245 = vmatpush1.msra.mxu0 0.0
      %246 = vmatprep.subr.mxu0 0.0
      %247 = vmatpush1.msra.mxu0 0.0
      %248 = vmatprep.mubr.f32.mxu0 0.0
      %249 = vmatmul.mubr.f32.gmra.mrb[0].mxu0 %v173
      %v250 = vpop.f32.mrb[0].mxu0
      %v251 = vadd.f32 0.0, %v250
      %v252 = vpop.f32.mrb[0].mxu0
      %253 = vmatprep.mubr.f32.mxu0 0.0
      %254 = vmatmul.mubr.f32.gmra.mrb[0].mxu0 %v176
      %v255 = vpop.f32.mrb[0].mxu0
      %v256 = vadd.f32 0.0, %v255
      %v257 = vpop.f32.mrb[0].mxu0
      %258 = vmatprep.mubr.f32.mxu0 0.0
      %259 = vmatmul.mubr.f32.gmra.mrb[0].mxu0 %v179
      %v260 = vpop.f32.mrb[0].mxu0
      %v261 = vadd.f32 0.0, %v260
      %v262 = vpop.f32.mrb[0].mxu0
      %263 = vmatprep.mubr.f32.mxu0 0.0
      %264 = vmatmul.mubr.f32.gmra.mrb[0].mxu0 %v182
      %v265 = vpop.f32.mrb[0].mxu0
      %v266 = vadd.f32 0.0, %v265
      %v267 = vpop.f32.mrb[0].mxu0
      %268 = vdwg.mxu0
      %v269 = vmax.f32 %v251, 0.0
      %v270 = vmax.f32 %v256, 0.0
      %v271 = vmax.f32 %v261, 0.0
      %v272 = vmax.f32 %v266, 0.0
      %v273 = vld [vmem:[#allocation3] sm:$0xff]
      %v274 = vld [vmem:[#allocation3 + $0x8] sm:$0xff]
      %v275 = vld [vmem:[#allocation3 + $0x10] sm:$0xff]
      %v276 = vld [vmem:[#allocation3 + $0x18] sm:$0xff]
      %v277 = vld [vmem:[%s4] sm:$0x1]
      %v279 = vlaneseq
      %v280 = vshrl.u32 %v279, 7
      %v281 = vsub.s32 0, %v280
      %v282 = vrot.slane %v277, %v281
      %v285 = vsel %vm56, %v269, 0
      %v288 = vsel %vm56, %v270, 0
      %v291 = vsel %vm56, %v271, 0
      %v294 = vsel %vm56, %v272, 0
      %296 = vmatprep.subr.mxu0 0.0
      %297 = vmatpush1.msra.mxu0 %v273
      %298 = vmatprep.subr.mxu0 0.0
      %299 = vmatpush1.msra.mxu0 %v274
      %300 = vmatprep.subr.mxu0 0.0
      %301 = vmatpush1.msra.mxu0 %v275
      %302 = vmatprep.subr.mxu0 0.0
      %303 = vmatpush1.msra.mxu0 %v276
      %304 = vmatprep.subr.mxu0 0.0
      %305 = vmatpush1.msra.mxu0 0.0
      %306 = vmatprep.subr.mxu0 0.0
      %307 = vmatpush1.msra.mxu0 0.0
      %308 = vmatprep.subr.mxu0 0.0
      %309 = vmatpush1.msra.mxu0 0.0
      %310 = vmatprep.subr.mxu0 0.0
      %311 = vmatpush1.msra.mxu0 0.0
      %312 = vmatprep.subr.mxu0 0.0
      %313 = vmatpush1.msra.mxu0 0.0
      %314 = vmatprep.subr.mxu0 0.0
      %315 = vmatpush1.msra.mxu0 0.0
      %316 = vmatprep.subr.mxu0 0.0
      %317 = vmatpush1.msra.mxu0 0.0
      %318 = vmatprep.subr.mxu0 0.0
      %319 = vmatpush1.msra.mxu0 0.0
      %320 = vmatprep.subr.mxu0 0.0
      %321 = vmatpush1.msra.mxu0 0.0
      %322 = vmatprep.subr.mxu0 0.0
      %323 = vmatpush1.msra.mxu0 0.0
      %324 = vmatprep.subr.mxu0 0.0
      %325 = vmatpush1.msra.mxu0 0.0
      %326 = vmatprep.subr.mxu0 0.0
      %327 = vmatpush1.msra.mxu0 0.0
      %328 = vmatprep.subr.mxu0 0.0
      %329 = vmatpush1.msra.mxu0 0.0
      %330 = vmatprep.subr.mxu0 0.0
      %331 = vmatpush1.msra.mxu0 0.0
      %332 = vmatprep.subr.mxu0 0.0
      %333 = vmatpush1.msra.mxu0 0.0
      %334 = vmatprep.subr.mxu0 0.0
      %335 = vmatpush1.msra.mxu0 0.0
      %336 = vmatprep.subr.mxu0 0.0
      %337 = vmatpush1.msra.mxu0 0.0
      %338 = vmatprep.subr.mxu0 0.0
      %339 = vmatpush1.msra.mxu0 0.0
      %340 = vmatprep.subr.mxu0 0.0
      %341 = vmatpush1.msra.mxu0 0.0
      %342 = vmatprep.subr.mxu0 0.0
      %343 = vmatpush1.msra.mxu0 0.0
      %344 = vmatprep.subr.mxu0 0.0
      %345 = vmatpush1.msra.mxu0 0.0
      %346 = vmatprep.subr.mxu0 0.0
      %347 = vmatpush1.msra.mxu0 0.0
      %348 = vmatprep.subr.mxu0 0.0
      %349 = vmatpush1.msra.mxu0 0.0
      %350 = vmatprep.subr.mxu0 0.0
      %351 = vmatpush1.msra.mxu0 0.0
      %352 = vmatprep.subr.mxu0 0.0
      %353 = vmatpush1.msra.mxu0 0.0
      %354 = vmatprep.subr.mxu0 0.0
      %355 = vmatpush1.msra.mxu0 0.0
      %356 = vmatprep.subr.mxu0 0.0
      %357 = vmatpush1.msra.mxu0 0.0
      %358 = vmatprep.subr.mxu0 0.0
      %359 = vmatpush1.msra.mxu0 0.0
      %360 = vmatprep.mubr.f32.mxu0 0.0
      %361 = vmatmul.mubr.f32.gmra.mrb[0].mxu0 %v285
      %v362 = vpop.f32.mrb[0].mxu0
      %v363 = vadd.f32 %v282, %v362
      %v364 = vpop.f32.mrb[0].mxu0
      %365 = vmatprep.mubr.f32.mxu0 0.0
      %366 = vmatmul.mubr.f32.gmra.mrb[0].mxu0 %v288
      %v367 = vpop.f32.mrb[0].mxu0
      %v368 = vadd.f32 %v282, %v367
      %v369 = vpop.f32.mrb[0].mxu0
      %370 = vmatprep.mubr.f32.mxu0 0.0
      %371 = vmatmul.mubr.f32.gmra.mrb[0].mxu0 %v291
      %v372 = vpop.f32.mrb[0].mxu0
      %v373 = vadd.f32 %v282, %v372
      %v374 = vpop.f32.mrb[0].mxu0
      %375 = vmatprep.mubr.f32.mxu0 0.0
      %376 = vmatmul.mubr.f32.gmra.mrb[0].mxu0 %v294
      %v377 = vpop.f32.mrb[0].mxu0
      %v378 = vadd.f32 %v282, %v377
      %v379 = vpop.f32.mrb[0].mxu0
      %380 = vdwg.mxu0
      %v381 = vlaneseq
      %v382 = vand.u32 %v381, 127
      %vm383 = vcmp.lt.s32.totalorder %v382, 8
      %v384 = vsel %vm383, %v363, -inf
      %v385 = vsel %vm383, %v368, -inf
      %v386 = vsel %vm383, %v373, -inf
      %v387 = vsel %vm383, %v378, -inf
      %v388 = vsel %vm383, %v363, inf
      %v389 = vsel %vm383, %v368, inf
      %v390 = vsel %vm383, %v373, inf
      %v391 = vsel %vm383, %v378, inf
      %392 = vmax.xlane.f32.xlu0 %v384
      %v393 = vpop.xlane.xlu0 %392
      %394 = vmax.xlane.f32.xlu0 %v385
      %v395 = vpop.xlane.xlu0 %394
      %396 = vmax.xlane.f32.xlu0 %v386
      %v397 = vpop.xlane.xlu0 %396
      %398 = vmax.xlane.f32.xlu0 %v387
      %v399 = vpop.xlane.xlu0 %398
      %400 = vmin.xlane.f32.xlu0 %v388
      %v401 = vpop.xlane.xlu0 %400
      %402 = vmin.xlane.f32.xlu0 %v389
      %v403 = vpop.xlane.xlu0 %402
      %404 = vmin.xlane.f32.xlu0 %v390
      %v405 = vpop.xlane.xlu0 %404
      %406 = vmin.xlane.f32.xlu0 %v391
      %v407 = vpop.xlane.xlu0 %406
      %v408 = vsub.f32 %v393, %v401
      %v409 = vsub.f32 %v395, %v403
      %v410 = vsub.f32 %v397, %v405
      %v411 = vsub.f32 %v399, %v407
      %v412 = vsub.f32 %v363, %v401
      %v413 = vsub.f32 %v368, %v403
      %v414 = vsub.f32 %v373, %v405
      %v415 = vsub.f32 %v378, %v407
      %v416 = vrcp.pop %v408
      %v417 = vmul.f32 %v412, %v416
      %v418 = vrcp.pop %v409
      %v419 = vmul.f32 %v413, %v418
      %v420 = vrcp.pop %v410
      %v421 = vmul.f32 %v414, %v420
      %v422 = vrcp.pop %v411
      %v423 = vmul.f32 %v415, %v422
      %v424 = vmul.f32 %v417, %v417
      %v425 = vmul.f32 %v419, %v419
      %v426 = vmul.f32 %v421, %v421
      %v427 = vmul.f32 %v423, %v423
      %v428 = vsel %vm383, %v424, 0.0
      %v429 = vsel %vm383, %v425, 0.0
      %v430 = vsel %vm383, %v426, 0.0
      %v431 = vsel %vm383, %v427, 0.0
      %432 = vadd.xlane.f32.xlu0 %v428
      %v433 = vpop.xlane.xlu0 %432
      %434 = vadd.xlane.f32.xlu0 %v429
      %v435 = vpop.xlane.xlu0 %434
      %436 = vadd.xlane.f32.xlu0 %v430
      %v437 = vpop.xlane.xlu0 %436
      %438 = vadd.xlane.f32.xlu0 %v431
      %v439 = vpop.xlane.xlu0 %438
      %v440 = vrsqrt.pop %v433
      %v441 = vmul.f32 %v433, %v440
      %vm442 = vcmp.eq.f32.partialorder %v433, inf
      %v443 = vsel %vm442, %v433, %v441
      %vm444 = vcmp.eq.f32.partialorder %v433, 0.0
      %v445 = vand.u32 %v433, 2147483648
      %v446 = vsel %vm444, %v445, %v443
      %v447 = vrsqrt.pop %v435
      %v448 = vmul.f32 %v435, %v447
      %vm449 = vcmp.eq.f32.partialorder %v435, inf
      %v450 = vsel %vm449, %v435, %v448
      %vm451 = vcmp.eq.f32.partialorder %v435, 0.0
      %v452 = vand.u32 %v435, 2147483648
      %v453 = vsel %vm451, %v452, %v450
      %v454 = vrsqrt.pop %v437
      %v455 = vmul.f32 %v437, %v454
      %vm456 = vcmp.eq.f32.partialorder %v437, inf
      %v457 = vsel %vm456, %v437, %v455
      %vm458 = vcmp.eq.f32.partialorder %v437, 0.0
      %v459 = vand.u32 %v437, 2147483648
      %v460 = vsel %vm458, %v459, %v457
      %v461 = vrsqrt.pop %v439
      %v462 = vmul.f32 %v439, %v461
      %vm463 = vcmp.eq.f32.partialorder %v439, inf
      %v464 = vsel %vm463, %v439, %v462
      %vm465 = vcmp.eq.f32.partialorder %v439, 0.0
      %v466 = vand.u32 %v439, 2147483648
      %v467 = vsel %vm465, %v466, %v464
      %v468 = vmax.f32 %v446, 1e-12
      %v469 = vmax.f32 %v453, 1e-12
      %v470 = vmax.f32 %v460, 1e-12
      %v471 = vmax.f32 %v467, 1e-12
      %v472 = vrcp.pop %v468
      %v473 = vmul.f32 %v417, %v472
      %v474 = vrcp.pop %v469
      %v475 = vmul.f32 %v419, %v474
      %v476 = vrcp.pop %v470
      %v477 = vmul.f32 %v421, %v476
      %v478 = vrcp.pop %v471
      %v479 = vmul.f32 %v423, %v478
      %480 = vst [vmem:[#allocation6] sm:$0xff] %v473
      %481 = vst [vmem:[#allocation6 + $0x8] sm:$0xff] %v475
      %482 = vst [vmem:[#allocation6 + $0x10] sm:$0xff] %v477
      %483 = vst [vmem:[#allocation6 + $0x18] sm:$0xff] %v479
    $region33: #{tpu_custom_call.1} parent=1 // pred_fallthru
      _
    // Predicated region
    $region34: #{tpu_custom_call.1} parent=1 // pred_check
      _
    $region35: #{tpu_custom_call.1} parent=1 // pred_check_branch
      %485 = sbr.rel (0) target = $region37
    $region36: #{tpu_custom_call.1} parent=1 // pred_region
      %s487 = ssub.s32 512, 512
      %488 = vsyncadd [#allocation5], %s487
      %s489 = sshll.u32 [#allocation6], 4
      %s490 = int_to_ptr.vmem [resolvable:$true] %s489
      %495 = dma.vmem_to_hbm [thread:$0]  %s490, 512, %s5, [#allocation5], 128, 128, 8
    $region37: #{tpu_custom_call.1} parent=1 // pred_fallthru
      _
    // Predicated region
    $region38: #{tpu_custom_call.1} parent=1 // pred_check
      _
    $region39: #{tpu_custom_call.1} parent=1 // pred_check_branch
      %497 = sbr.rel (0) target = $region41
    $region40: #{tpu_custom_call.1} parent=1 // pred_region
      %498 = dma.done [#allocation5], 512
    $region41: #{tpu_custom_call.1} parent=1 // pred_fallthru
      _
    %499 = vsyncpa [#allocation4], 1
    %500 = vsyncpa [#allocation5], 1

</llo_original>
